<compile_context>
chip_gen: v7x
topology: tpu7x:2x2x1
jax: 0.10.0
libtpu: 0.0.40
codegen_flags: <defaults>
</compile_context>

<pallas_src>
import math

import jax
import jax.numpy as jnp
from jax.experimental import pallas as pl
from jax.experimental.pallas import tpu as pltpu


def _round_up(x, m):
    return ((x + m - 1) // m) * m


def _intensity_encode_kernel(x_ref, w_ref, b_ref, affect_ref, base_ref):
    """affect = tanh(x @ Wa + ba) ; base = x @ Wb + bb  (fused wide matmul).

    x_ref:      (tm, d_model)
    w_ref:      (d_model, 2*d_inner)   fused [Wa | Wb], grid-resident
    b_ref:      (1, 2*d_inner)         fused [ba | bb], f32
    affect_ref: (tm, d_inner)
    base_ref:   (tm, d_inner)
    """
    acc = jnp.dot(x_ref[...], w_ref[...], preferred_element_type=jnp.float32)
    acc = acc + b_ref[...]
    d = affect_ref.shape[-1]
    # tanh only on the affect half; both slices are value slices of the f32
    # accumulator (lane-aligned and free when d_inner % 128 == 0).
    affect_ref[...] = jnp.tanh(acc[:, :d]).astype(affect_ref.dtype)
    base_ref[...] = acc[:, d:].astype(base_ref.dtype)


def _default_vmem_budget():
    """~2/3 of physical VMEM on this chip; conservative 64 MiB assumption
    (v7x-sized) if the query is unavailable."""
    phys = None
    try:
        info = pltpu.get_tpu_info()
        phys = getattr(info, "vmem_capacity_bytes", None)
    except Exception:
        phys = None
    if not phys:
        phys = 64 * 1024 * 1024
    return int(phys) * 2 // 3


def _pick_tm(M, d_model, d_inner, x_itemsize, w_itemsize, out_itemsize,
             requested, vmem_budget_bytes):
    """Largest row tile that fits the VMEM budget.

    Budgeted VMEM:
      resident: fused W (single-buffered) + fused f32 bias
      per row : double-buffered x tile + double-buffered affect & base tiles
                (at the OUTPUT itemsize)
    """
    sublane = max(8, 32 // x_itemsize)          # 8 f32, 16 bf16, 32 int8/fp8
    d_out = 2 * d_inner
    resident = d_model * d_out * w_itemsize + d_out * 4
    per_row = 2 * d_model * x_itemsize + 2 * d_out * out_itemsize
    avail = vmem_budget_bytes - resident
    if avail < per_row * sublane:
        # TODO(synk): stream W via an extra d_out grid axis (tn multiple of 256)
        # when the fused weight cannot stay resident (very large d_model*d_inner,
        # mainly an issue on v7x's 64 MiB VMEM).
        raise ValueError(
            f"resident fused weight ({resident} B) leaves no room for a "
            f"{sublane}-row tile within the VMEM budget ({vmem_budget_bytes} B)")
    tm_vmem_cap = max(sublane, (avail // per_row) // sublane * sublane)

    # Keep >= 2 grid steps (one per v7x TensorCore; hides first-load/last-store
    # DMA); prefer >= 8 steps as long as the tile stays >= 512 rows, which is
    # already ~85% of HBM roofline.
    two_step = _round_up(pl.cdiv(M, 2), sublane)
    eight_step = _round_up(pl.cdiv(M, 8), sublane)
    tm_steps_cap = eight_step if eight_step >= 512 else two_step

    tm = min(requested, tm_vmem_cap, tm_steps_cap, _round_up(M, sublane))
    tm = max(sublane, (tm // sublane) * sublane)
    return tm


def prepare_intensity_params(wa, ba, wb, bb, *, compute_dtype=None):
    """Fuse [Wa|Wb] and [ba|bb] once (hoisted out of the per-call path)."""
    w_fused = jnp.concatenate([wa, wb], axis=1)           # (d_model, 2*d_inner)
    if compute_dtype is not None:
        w_fused = w_fused.astype(compute_dtype)
    b_fused = jnp.concatenate([ba, bb]).reshape(1, -1).astype(jnp.float32)
    return w_fused, b_fused


def intensity_encode_fused_forward(enc_output, w_fused, b_fused, *, tm=1024,
                                   compute_dtype=None, out_dtype=None,
                                   vmem_budget_bytes=None):
    """
    enc_output: [B, L, d_model]
    w_fused:    [d_model, 2*d_inner]   (prepare_intensity_params)
    b_fused:    [1, 2*d_inner] f32
    compute_dtype: optional operand dtype (e.g. bf16); accumulate/bias/tanh stay f32.
    out_dtype:     optional store dtype (default: enc_output.dtype).
    returns (affect, base): each [B, L, d_inner]
    """
    B, L, d_model = enc_output.shape
    d_out = w_fused.shape[1]
    d_inner = d_out // 2
    out_dtype = enc_output.dtype if out_dtype is None else jnp.dtype(out_dtype)

    x2d = enc_output.reshape(B * L, d_model)
    if compute_dtype is not None:
        x2d = x2d.astype(compute_dtype)
        w_fused = w_fused.astype(compute_dtype)   # no-op if already prepared in it

    M = B * L
    if vmem_budget_bytes is None:
        vmem_budget_bytes = _default_vmem_budget()
    tm_eff = _pick_tm(M, d_model, d_inner,
                      jnp.dtype(x2d.dtype).itemsize,
                      jnp.dtype(w_fused.dtype).itemsize,
                      jnp.dtype(out_dtype).itemsize,
                      tm, vmem_budget_bytes)

    grid = (pl.cdiv(M, tm_eff),)   # ragged last block: padded reads, masked writes

    affect2d, base2d = pl.pallas_call(
        _intensity_encode_kernel,
        out_shape=(jax.ShapeDtypeStruct((M, d_inner), out_dtype),
                   jax.ShapeDtypeStruct((M, d_inner), out_dtype)),
        grid_spec=pl.GridSpec(
            grid=grid,
            in_specs=[
                pl.BlockSpec((tm_eff, d_model), lambda i: (i, 0)),       # x tile
                pl.BlockSpec((d_model, d_out), lambda i: (0, 0),         # fused W
                             pipeline_mode=pl.Buffered(1)),              # resident
                pl.BlockSpec((1, d_out), lambda i: (0, 0),               # fused bias
                             pipeline_mode=pl.Buffered(1)),
            ],
            out_specs=[
                pl.BlockSpec((tm_eff, d_inner), lambda i: (i, 0)),       # affect
                pl.BlockSpec((tm_eff, d_inner), lambda i: (i, 0)),       # base
            ],
        ),
        compiler_params=pltpu.CompilerParams(
            dimension_semantics=("parallel",),
            vmem_limit_bytes=int(vmem_budget_bytes)),
    )(x2d, w_fused, b_fused)

    return (affect2d.reshape(B, L, d_inner), base2d.reshape(B, L, d_inner))


def intensity_encode_forward(enc_output, wa, ba, wb, bb, **kwargs):
    """Convenience wrapper (fuses params per call; prefer prepare_ + fused_)."""
    w_fused, b_fused = prepare_intensity_params(
        wa, ba, wb, bb, compute_dtype=kwargs.get("compute_dtype"))
    return intensity_encode_fused_forward(enc_output, w_fused, b_fused, **kwargs)


def _init_linear(key, in_features, out_features):
    """Deterministic init mimicking torch.nn.Linear defaults (uniform +/-1/sqrt(in))."""
    kw, kb = jax.random.split(key)
    bound = 1.0 / math.sqrt(in_features)
    # torch stores W as [out, in]; we keep the transposed [in, out] for x @ W.
    w = jax.random.uniform(kw, (in_features, out_features), jnp.float32,
                           minval=-bound, maxval=bound)
    b = jax.random.uniform(kb, (out_features,), jnp.float32,
                           minval=-bound, maxval=bound)
    return w, b


if __name__ == "__main__":
    # Small shapes consistent with the module: batch=2, seq=8, d_model=32, d_inner=32.
    B, L, d_model, d_inner = 2, 8, 32, 32

    root = jax.random.PRNGKey(0)
    k_x, k_base, k_affect = jax.random.split(root, 3)

    enc_output = jax.random.normal(k_x, (B, L, d_model), jnp.float32)
    wb, bb = _init_linear(k_base, d_model, d_inner)     # base_layer
    wa, ba = _init_linear(k_affect, d_model, d_inner)   # affect_layer

    # Hoisted, per-model fused params (reused across calls below).
    w_fused, b_fused = prepare_intensity_params(wa, ba, wb, bb)

    affect_ref = jnp.tanh(enc_output @ wa + ba)
    base_ref = enc_output @ wb + bb

    # 1) f32 path, tight check against pure-JAX reference.
    affect, base = intensity_encode_fused_forward(enc_output, w_fused, b_fused)
    jax.block_until_ready((affect, base))
    assert affect.shape == (B, L, d_inner) and base.shape == (B, L, d_inner)
    assert jnp.allclose(affect, affect_ref, atol=1e-5, rtol=1e-5)
    assert jnp.allclose(base, base_ref, atol=1e-5, rtol=1e-5)

    # 2) Ragged token count (B*L = 26, not a multiple of the tile) exercises the
    #    cdiv grid with a masked last block — no wrapper-side pad/slice.
    L2 = 13
    enc2 = jax.random.normal(jax.random.PRNGKey(1), (B, L2, d_model), jnp.float32)
    a2, b2 = intensity_encode_fused_forward(enc2, w_fused, b_fused)
    jax.block_until_ready((a2, b2))
    assert a2.shape == (B, L2, d_inner) and b2.shape == (B, L2, d_inner)
    assert jnp.allclose(a2, jnp.tanh(enc2 @ wa + ba), atol=1e-5, rtol=1e-5)
    assert jnp.allclose(b2, enc2 @ wb + bb, atol=1e-5, rtol=1e-5)

    # 3) bf16 operands + bf16 stores (f32 accumulate / bias / tanh), loose tolerance.
    a3, b3 = intensity_encode_forward(enc_output, wa, ba, wb, bb,
                                      compute_dtype=jnp.bfloat16,
                                      out_dtype=jnp.bfloat16)
    jax.block_until_ready((a3, b3))
    assert a3.dtype == jnp.bfloat16 and b3.dtype == jnp.bfloat16
    assert jnp.allclose(a3.astype(jnp.float32), affect_ref, atol=5e-2, rtol=5e-2)
    assert jnp.allclose(b3.astype(jnp.float32), base_ref, atol=5e-2, rtol=5e-2)

    print("KERNEL_OK")
</pallas_src>

<mosaic_0001>
module attributes {stable_mosaic.version = 11 : i64} {
  func.func @_intensity_encode_kernel(%arg0: i32, %arg1: memref<8x32xf32, #tpu.memory_space<vmem>>, %arg2: memref<32x64xf32, #tpu.memory_space<vmem>>, %arg3: memref<1x64xf32, #tpu.memory_space<vmem>>, %arg4: memref<8x32xf32, #tpu.memory_space<vmem>>, %arg5: memref<8x32xf32, #tpu.memory_space<vmem>>) attributes {dimension_semantics = [#tpu.dimension_semantics<parallel>], iteration_bounds = array<i64: 2>, scalar_prefetch = 0 : i64, scratch_operands = 0 : i64, tpu.core_type = #tpu.core_type<tc>, window_params = [{transform_indices = @transform_0, window_bounds = array<i64: 8, 32>}, {pipeline_mode = #tpu.pipeline_mode<synchronous>, transform_indices = @transform_1, window_bounds = array<i64: 32, 64>}, {pipeline_mode = #tpu.pipeline_mode<synchronous>, transform_indices = @transform_2, window_bounds = array<i64: 1, 64>}, {transform_indices = @transform_3, window_bounds = array<i64: 8, 32>}, {transform_indices = @transform_4, window_bounds = array<i64: 8, 32>}]} {
    %c0 = arith.constant 0 : index
    %c0_0 = arith.constant 0 : index
    %0 = vector.load %arg1[%c0, %c0_0] : memref<8x32xf32, #tpu.memory_space<vmem>>, vector<8x32xf32>
    %c0_1 = arith.constant 0 : index
    %c0_2 = arith.constant 0 : index
    %1 = vector.load %arg2[%c0_1, %c0_2] : memref<32x64xf32, #tpu.memory_space<vmem>>, vector<32x64xf32>
    %cst = arith.constant dense<0.000000e+00> : vector<8x64xf32>
    %2 = tpu.matmul %0, %1, %cst {dimension_numbers = #tpu.dot_dimension_numbers<[1], [0], [0], [1], [0, 0, 1, 1], [], []>} : vector<8x32xf32>, vector<32x64xf32>, vector<8x64xf32> -> vector<8x64xf32>
    %c0_3 = arith.constant 0 : index
    %c0_4 = arith.constant 0 : index
    %3 = vector.load %arg3[%c0_3, %c0_4] : memref<1x64xf32, #tpu.memory_space<vmem>>, vector<1x64xf32>
    %4 = vector.broadcast %3 : vector<1x64xf32> to vector<8x64xf32>
    %5 = arith.addf %2, %4 : vector<8x64xf32>
    %6 = vector.extract_strided_slice %5 {offsets = [0, 0], sizes = [8, 32], strides = [1, 1]} : vector<8x64xf32> to vector<8x32xf32>
    %7 = math.tanh %6 : vector<8x32xf32>
    %c0_5 = arith.constant 0 : index
    %c0_6 = arith.constant 0 : index
    %8 = vector.load %arg4[%c0_5, %c0_6] : memref<8x32xf32, #tpu.memory_space<vmem>>, vector<8x32xf32>
    tpu.vector_store %arg4[%c0_5, %c0_6], %7 {strides = array<i32>} : memref<8x32xf32, #tpu.memory_space<vmem>>, vector<8x32xf32>,
    %9 = vector.extract_strided_slice %5 {offsets = [0, 32], sizes = [8, 32], strides = [1, 1]} : vector<8x64xf32> to vector<8x32xf32>
    %c0_7 = arith.constant 0 : index
    %c0_8 = arith.constant 0 : index
    %10 = vector.load %arg5[%c0_7, %c0_8] : memref<8x32xf32, #tpu.memory_space<vmem>>, vector<8x32xf32>
    tpu.vector_store %arg5[%c0_7, %c0_8], %9 {strides = array<i32>} : memref<8x32xf32, #tpu.memory_space<vmem>>, vector<8x32xf32>,
    return
  }
  func.func @transform_0(%arg0: i32) -> (i32, i32) {
    %c0_i32 = arith.constant 0 : i32
    %c0_i32_0 = arith.constant 0 : i32
    return %arg0, %c0_i32 : i32, i32
  }
  func.func @transform_1(%arg0: i32) -> (i32, i32) {
    %c0_i32 = arith.constant 0 : i32
    %c0_i32_0 = arith.constant 0 : i32
    %c0_i32_1 = arith.constant 0 : i32
    return %c0_i32, %c0_i32_0 : i32, i32
  }
  func.func @transform_2(%arg0: i32) -> (i32, i32) {
    %c0_i32 = arith.constant 0 : i32
    %c0_i32_0 = arith.constant 0 : i32
    %c0_i32_1 = arith.constant 0 : i32
    return %c0_i32, %c0_i32_0 : i32, i32
  }
  func.func @transform_3(%arg0: i32) -> (i32, i32) {
    %c0_i32 = arith.constant 0 : i32
    %c0_i32_0 = arith.constant 0 : i32
    return %arg0, %c0_i32 : i32, i32
  }
  func.func @transform_4(%arg0: i32) -> (i32, i32) {
    %c0_i32 = arith.constant 0 : i32
    %c0_i32_0 = arith.constant 0 : i32
    return %arg0, %c0_i32 : i32, i32
  }
}

</mosaic_0001>

<llo_original>
// kernel: tpu_custom_call.1
$region0: #{tpu_custom_call.1}
  #allocation0 [shape = 'u32[]', space=smem, size = 0x4, offset = 0x4, fixed_abs, tag = 'smem constant byte address 0x4 - core index']
  #allocation1 [shape = 'u32[144,128]{1,0:T(1,128)}', space=vmem, size = 0x12000, scoped, tag = 'internal scratch']
  %s0 = inlined_call_operand.hbm [shape: f32[16,32], index: 0, kind: input, shape index: {}]
  %s1 = inlined_call_operand.hbm [shape: f32[32,64], index: 1, kind: input, shape index: {}]
  %s2 = inlined_call_operand.vmem [shape: f32[1,64], index: 2, kind: input, shape index: {}]
  %s3 = inlined_call_operand.hbm [shape: f32[16,32], index: 3, kind: output, shape index: {0}]
  %s4 = inlined_call_operand.hbm [shape: f32[16,32], index: 4, kind: output, shape index: {1}]
  %5 = xla_tuple %s3, %s4
  %s6 = sld [smem:[#allocation0]]
  $region61: #{tpu_custom_call.1} parent=0
    _
  %s8 = ssub.s32 1, %s6
  %s9 = scalar_select 0, %s8, %s6
  $region1: #{tpu_custom_call.1} parent=0
    #allocation2 [shape = 'u8[8192]{0}', space=vmem, size = 0x2000, scoped, tag = 'input window, operand 0']
    #allocation3 [shape = 's32[2]{0}', space=sflag, size = 0x8, scoped, tag = 'scoped memory for tpu_custom_call.1']
    #allocation4 [shape = 's32[2]{0}', space=sflag, size = 0x8, scoped, tag = 'scoped memory for tpu_custom_call.1']
    #allocation5 [shape = 'u8[16384]{0}', space=vmem, size = 0x4000, scoped, tag = 'input window, operand 1, single buffered']
    #allocation6 [shape = 's32[1]{0}', space=sflag, size = 0x4, scoped, tag = 'scoped memory for tpu_custom_call.1']
    #allocation7 [shape = 'u8[8192]{0}', space=vmem, size = 0x2000, scoped, tag = 'output window, operand 0']
    #allocation8 [shape = 'u8[8192]{0}', space=vmem, size = 0x2000, scoped, tag = 'output window, operand 1']
    #allocation9 [shape = 's32[2]{0}', space=sflag, size = 0x8, scoped, tag = 'scoped memory for tpu_custom_call.1']
    %10 = vsyncpa [#allocation3], 0
    %s11 = scalar_lea.sflag [#allocation3], 1
    %12 = vsyncpa %s11, 0
    %13 = vsyncpa [#allocation6], 0
    %14 = vsyncpa [#allocation4], 0
    %s15 = scalar_lea.sflag [#allocation4], 1
    %16 = vsyncpa %s15, 0
    %17 = vsyncpa [#allocation9], 0
    %s18 = scalar_lea.sflag [#allocation9], 1
    %19 = vsyncpa %s18, 0
    loop: start=0, step=1, limit=4
    $region2: #{tpu_custom_call.1} parent=1 // loop_pre_header
      _
    $region3: #{tpu_custom_call.1} parent=1 // loop_header
      %s21 = sphi 0, %s25
      %p22 = scmp.ge.s32.totalorder %s21, 4
      %s31 = sphi 0, %s33
      %s34 = sphi 0, %s31
      %s35 = sphi 0, %s34
      %s51 = sphi 0, %s35
      %s55 = sphi 0, %s55
      %s57 = sphi 0, %s55
      %s58 = sphi 0, %s57
      %s72 = sphi 0, %s58
      %s76 = sphi 0, %s76
      %s78 = sphi 0, %s76
      %s79 = sphi 0, %s78
      %s93 = sphi 0, %s79
      %s99 = sphi 0, %s101
      %s102 = sphi 0, %s99
      %s103 = sphi 0, %s102
      %s119 = sphi 0, %s103
      %s125 = sphi 0, %s127
      %s128 = sphi 0, %s125
      %s129 = sphi 0, %s128
      %s145 = sphi 0, %s129
    $region4: #{tpu_custom_call.1} parent=1 // loop_header_branch
      %24 = sbr.rel (%p22) target = $region8
    $region5: #{tpu_custom_call.1} parent=1 // loop_body
      %s26 = ssub.s32 %s21, 1
      %s27 = ssub.s32 %s21, 2
      %s28 = sadd.s32 %s21, 1
      %s29 = ssub.s32 %s21, %s28
      %p30 = scmp.eq.s32.totalorder %s29, 0
      %s32 = sadd.s32 %s31, 1
      %s33 = scalar_select %p30, %s31, %s32
      %p36 = pneg %p30
      %p37 = scmp.eq.s32.totalorder %s21, 1
      %p38 = por %p36, %p37
      %p39 = scmp.ne.s32.totalorder %s31, %s34
      %p40 = scmp.eq.s32.totalorder %s21, 0
      %p41 = por %p39, %p40
      %p42 = scmp.ne.s32.totalorder %s31, %s34
      %p43 = scmp.eq.s32.totalorder %s26, 1
      %p44 = por %p42, %p43
      %p45 = scmp.ne.s32.totalorder %s34, %s35
      %p46 = scmp.eq.s32.totalorder %s26, 0
      %p47 = por %p45, %p46
      %p48 = scmp.ne.s32.totalorder %s34, %s35
      %p49 = scmp.eq.s32.totalorder %s27, 1
      %p50 = por %p48, %p49
      %p52 = scmp.ne.s32.totalorder %s35, %s51
      %p53 = scmp.eq.s32.totalorder %s27, 0
      %p54 = por %p52, %p53
      %s56 = sadd.s32 %s55, 1
      %p59 = scmp.eq.s32.totalorder %s21, 1
      %p60 = scmp.ne.s32.totalorder %s55, %s57
      %p61 = scmp.eq.s32.totalorder %s21, 0
      %p62 = por %p60, %p61
      %p63 = scmp.ne.s32.totalorder %s55, %s57
      %p64 = scmp.eq.s32.totalorder %s26, 1
      %p65 = por %p63, %p64
      %p66 = scmp.ne.s32.totalorder %s57, %s58
      %p67 = scmp.eq.s32.totalorder %s26, 0
      %p68 = por %p66, %p67
      %p69 = scmp.ne.s32.totalorder %s57, %s58
      %p70 = scmp.eq.s32.totalorder %s27, 1
      %p71 = por %p69, %p70
      %p73 = scmp.ne.s32.totalorder %s58, %s72
      %p74 = scmp.eq.s32.totalorder %s27, 0
      %p75 = por %p73, %p74
      %s77 = sadd.s32 %s76, 1
      %p80 = scmp.eq.s32.totalorder %s21, 1
      %p81 = scmp.ne.s32.totalorder %s76, %s78
      %p82 = scmp.eq.s32.totalorder %s21, 0
      %p83 = por %p81, %p82
      %p84 = scmp.ne.s32.totalorder %s76, %s78
      %p85 = scmp.eq.s32.totalorder %s26, 1
      %p86 = por %p84, %p85
      %p87 = scmp.ne.s32.totalorder %s78, %s79
      %p88 = scmp.eq.s32.totalorder %s26, 0
      %p89 = por %p87, %p88
      %p90 = scmp.ne.s32.totalorder %s78, %s79
      %p91 = scmp.eq.s32.totalorder %s27, 1
      %p92 = por %p90, %p91
      %p94 = scmp.ne.s32.totalorder %s79, %s93
      %p95 = scmp.eq.s32.totalorder %s27, 0
      %p96 = por %p94, %p95
      %s97 = ssub.s32 %s21, %s28
      %p98 = scmp.eq.s32.totalorder %s97, 0
      %s100 = sadd.s32 %s99, 1
      %s101 = scalar_select %p98, %s99, %s100
      %p104 = pneg %p98
      %p105 = scmp.eq.s32.totalorder %s21, 1
      %p106 = por %p104, %p105
      %p107 = scmp.ne.s32.totalorder %s99, %s102
      %p108 = scmp.eq.s32.totalorder %s21, 0
      %p109 = por %p107, %p108
      %p110 = scmp.ne.s32.totalorder %s99, %s102
      %p111 = scmp.eq.s32.totalorder %s26, 1
      %p112 = por %p110, %p111
      %p113 = scmp.ne.s32.totalorder %s102, %s103
      %p114 = scmp.eq.s32.totalorder %s26, 0
      %p115 = por %p113, %p114
      %p116 = scmp.ne.s32.totalorder %s102, %s103
      %p117 = scmp.eq.s32.totalorder %s27, 1
      %p118 = por %p116, %p117
      %p120 = scmp.ne.s32.totalorder %s103, %s119
      %p121 = scmp.eq.s32.totalorder %s27, 0
      %p122 = por %p120, %p121
      %s123 = ssub.s32 %s21, %s28
      %p124 = scmp.eq.s32.totalorder %s123, 0
      %s126 = sadd.s32 %s125, 1
      %s127 = scalar_select %p124, %s125, %s126
      %p130 = pneg %p124
      %p131 = scmp.eq.s32.totalorder %s21, 1
      %p132 = por %p130, %p131
      %p133 = scmp.ne.s32.totalorder %s125, %s128
      %p134 = scmp.eq.s32.totalorder %s21, 0
      %p135 = por %p133, %p134
      %p136 = scmp.ne.s32.totalorder %s125, %s128
      %p137 = scmp.eq.s32.totalorder %s26, 1
      %p138 = por %p136, %p137
      %p139 = scmp.ne.s32.totalorder %s128, %s129
      %p140 = scmp.eq.s32.totalorder %s26, 0
      %p141 = por %p139, %p140
      %p142 = scmp.ne.s32.totalorder %s128, %s129
      %p143 = scmp.eq.s32.totalorder %s27, 1
      %p144 = por %p142, %p143
      %p146 = scmp.ne.s32.totalorder %s129, %s145
      %p147 = scmp.eq.s32.totalorder %s27, 0
      %p148 = por %p146, %p147
      %p149 = scmp.le.s32.totalorder 1, %s21
      %p150 = scmp.lt.s32.totalorder %s21, 3
      %p151 = pnand %p149, %p150
      %p152 = pneg %p151
      // Predicated region
      $region9: #{tpu_custom_call.1} parent=5 // pred_check
        _
      $region10: #{tpu_custom_call.1} parent=5 // pred_check_branch
        %154 = sbr.rel (%p151) target = $region12
      $region11: #{tpu_custom_call.1} parent=5 // pred_region
        %s155 = ssub.s32 %s21, 1
        // Predicated region
        $region13: #{tpu_custom_call.1} parent=11 // pred_check
          %p156 = pneg %p68
        $region14: #{tpu_custom_call.1} parent=11 // pred_check_branch
          %158 = sbr.rel (%p156) target = $region16
        $region15: #{tpu_custom_call.1} parent=11 // pred_region
          %s160 = ssub.s32 512, 512
          %161 = vsyncadd [#allocation6], %s160
          %s162 = sshll.u32 [#allocation5], 4
          %s163 = int_to_ptr.vmem [resolvable:$true] %s162
          %168 = dma.hbm_to_vmem [thread:$0]  %s1, 512, %s163, [#allocation6], 128, 128, 8
        $region16: #{tpu_custom_call.1} parent=11 // pred_fallthru
          _
        // Predicated region
        $region17: #{tpu_custom_call.1} parent=11 // pred_check
          %p169 = pneg %p89
        $region18: #{tpu_custom_call.1} parent=11 // pred_check_branch
          %171 = sbr.rel (%p169) target = $region20
        $region19: #{tpu_custom_call.1} parent=11 // pred_region
          _
        $region20: #{tpu_custom_call.1} parent=11 // pred_fallthru
          _
      $region12: #{tpu_custom_call.1} parent=5 // pred_fallthru
        _
      %p172 = scmp.lt.s32.totalorder %s21, 2
      // Predicated region
      $region21: #{tpu_custom_call.1} parent=5 // pred_check
        %p173 = pneg %p172
      $region22: #{tpu_custom_call.1} parent=5 // pred_check_branch
        %175 = sbr.rel (%p173) target = $region24
      $region23: #{tpu_custom_call.1} parent=5 // pred_region
        // Predicated region
        $region25: #{tpu_custom_call.1} parent=23 // pred_check
          %p176 = pneg %p41
        $region26: #{tpu_custom_call.1} parent=23 // pred_check_branch
          %178 = sbr.rel (%p176) target = $region28
        $region27: #{tpu_custom_call.1} parent=23 // pred_region
          %s179 = sand.u32 %s31, 1
          %s180 = scalar_lea.sflag [#allocation3], %s179
          %s181 = sand.u32 %s31, 1
          %s182 = smul.addr %s181, 8
          %s183 = scalar_lea.vmem [#allocation2], %s182
          %s185 = ssub.s32 128, 128
          %186 = vsyncadd %s180, %s185
          %s187 = smul.addr %s21, 128
          %s188 = scalar_lea.hbm %s0, %s187
          %s190 = sshll.u32 %s183, 4
          %s191 = int_to_ptr.vmem [resolvable:$true] %s190
          %193 = dma.hbm_to_vmem [thread:$0]  %s188, 128, %s191, %s180
        $region28: #{tpu_custom_call.1} parent=23 // pred_fallthru
          _
      $region24: #{tpu_custom_call.1} parent=5 // pred_fallthru
        _
      %p194 = scmp.le.s32.totalorder 1, %s21
      %p195 = scmp.lt.s32.totalorder %s21, 3
      %p196 = pnand %p194, %p195
      %p197 = pneg %p196
      // Predicated region
      $region29: #{tpu_custom_call.1} parent=5 // pred_check
        _
      $region30: #{tpu_custom_call.1} parent=5 // pred_check_branch
        %199 = sbr.rel (%p196) target = $region32
      $region31: #{tpu_custom_call.1} parent=5 // pred_region
        %s200 = ssub.s32 %s21, 1
        %s201 = sand.u32 %s34, 1
        %s202 = scalar_lea.sflag [#allocation3], %s201
        %s203 = sand.u32 %s34, 1
        %s204 = smul.addr %s203, 8
        %s205 = scalar_lea.vmem [#allocation2], %s204
        // Predicated region
        $region33: #{tpu_custom_call.1} parent=31 // pred_check
          %p206 = pneg %p47
        $region34: #{tpu_custom_call.1} parent=31 // pred_check_branch
          %208 = sbr.rel (%p206) target = $region36
        $region35: #{tpu_custom_call.1} parent=31 // pred_region
          %209 = dma.done %s202, 128
        $region36: #{tpu_custom_call.1} parent=31 // pred_fallthru
          _
        // Predicated region
        $region37: #{tpu_custom_call.1} parent=31 // pred_check
          %p210 = pneg %p68
        $region38: #{tpu_custom_call.1} parent=31 // pred_check_branch
          %212 = sbr.rel (%p210) target = $region40
        $region39: #{tpu_custom_call.1} parent=31 // pred_region
          %213 = dma.done [#allocation6], 512
        $region40: #{tpu_custom_call.1} parent=31 // pred_fallthru
          _
        %s214 = sand.u32 %s34, 1
        %s215 = scalar_lea.sflag [#allocation3], %s214
        %s216 = sand.u32 %s34, 1
        %s217 = smul.addr %s216, 8
        %s218 = scalar_lea.vmem [#allocation2], %s217
        %p219 = pneg %p47
        %p220 = pneg %p44
        %p221 = pneg %p68
        %p222 = pneg %p65
        %p223 = pneg %p89
        %p224 = pneg %p86
        %p225 = pneg %p115
        %p226 = pneg %p112
        %s227 = sand.u32 %s102, 1
        %s228 = scalar_lea.sflag [#allocation4], %s227
        %s229 = sand.u32 %s102, 1
        %s230 = smul.addr %s229, 8
        %s231 = scalar_lea.vmem [#allocation7], %s230
        %p232 = pneg %p141
        %p233 = pneg %p138
        %s234 = sand.u32 %s128, 1
        %s235 = scalar_lea.sflag [#allocation9], %s234
        %s236 = sand.u32 %s128, 1
        %s237 = smul.addr %s236, 8
        %s238 = scalar_lea.vmem [#allocation8], %s237
        %v239 = vld [vmem:[%s205] sm:$0xff]
        %v240 = vld [vmem:[#allocation5] sm:$0xff]
        %v241 = vld [vmem:[#allocation5 + $0x8] sm:$0xff]
        %v242 = vld [vmem:[#allocation5 + $0x10] sm:$0xff]
        %v243 = vld [vmem:[#allocation5 + $0x18] sm:$0xff]
        %v244 = vld [vmem:[%s2] sm:$0x1]
        %v246 = vlaneseq
        %v247 = vshrl.u32 %v246, 7
        %v248 = vsub.s32 0, %v247
        %v249 = vrot.slane %v244, %v248
        %vm251 = vcmask 261120
        %v253 = vsel %vm251, %v239, 0
        %255 = vmatprep.subr.mxu0 0.0
        %256 = vmatpush1.msra.mxu0 %v240
        %257 = vmatprep.subr.mxu0 0.0
        %258 = vmatpush1.msra.mxu0 %v241
        %259 = vmatprep.subr.mxu0 0.0
        %260 = vmatpush1.msra.mxu0 %v242
        %261 = vmatprep.subr.mxu0 0.0
        %262 = vmatpush1.msra.mxu0 %v243
        %263 = vmatprep.subr.mxu0 0.0
        %264 = vmatpush1.msra.mxu0 0.0
        %265 = vmatprep.subr.mxu0 0.0
        %266 = vmatpush1.msra.mxu0 0.0
        %267 = vmatprep.subr.mxu0 0.0
        %268 = vmatpush1.msra.mxu0 0.0
        %269 = vmatprep.subr.mxu0 0.0
        %270 = vmatpush1.msra.mxu0 0.0
        %271 = vmatprep.subr.mxu0 0.0
        %272 = vmatpush1.msra.mxu0 0.0
        %273 = vmatprep.subr.mxu0 0.0
        %274 = vmatpush1.msra.mxu0 0.0
        %275 = vmatprep.subr.mxu0 0.0
        %276 = vmatpush1.msra.mxu0 0.0
        %277 = vmatprep.subr.mxu0 0.0
        %278 = vmatpush1.msra.mxu0 0.0
        %279 = vmatprep.subr.mxu0 0.0
        %280 = vmatpush1.msra.mxu0 0.0
        %281 = vmatprep.subr.mxu0 0.0
        %282 = vmatpush1.msra.mxu0 0.0
        %283 = vmatprep.subr.mxu0 0.0
        %284 = vmatpush1.msra.mxu0 0.0
        %285 = vmatprep.subr.mxu0 0.0
        %286 = vmatpush1.msra.mxu0 0.0
        %287 = vmatprep.subr.mxu0 0.0
        %288 = vmatpush1.msra.mxu0 0.0
        %289 = vmatprep.subr.mxu0 0.0
        %290 = vmatpush1.msra.mxu0 0.0
        %291 = vmatprep.subr.mxu0 0.0
        %292 = vmatpush1.msra.mxu0 0.0
        %293 = vmatprep.subr.mxu0 0.0
        %294 = vmatpush1.msra.mxu0 0.0
        %295 = vmatprep.subr.mxu0 0.0
        %296 = vmatpush1.msra.mxu0 0.0
        %297 = vmatprep.subr.mxu0 0.0
        %298 = vmatpush1.msra.mxu0 0.0
        %299 = vmatprep.subr.mxu0 0.0
        %300 = vmatpush1.msra.mxu0 0.0
        %301 = vmatprep.subr.mxu0 0.0
        %302 = vmatpush1.msra.mxu0 0.0
        %303 = vmatprep.subr.mxu0 0.0
        %304 = vmatpush1.msra.mxu0 0.0
        %305 = vmatprep.subr.mxu0 0.0
        %306 = vmatpush1.msra.mxu0 0.0
        %307 = vmatprep.subr.mxu0 0.0
        %308 = vmatpush1.msra.mxu0 0.0
        %309 = vmatprep.subr.mxu0 0.0
        %310 = vmatpush1.msra.mxu0 0.0
        %311 = vmatprep.subr.mxu0 0.0
        %312 = vmatpush1.msra.mxu0 0.0
        %313 = vmatprep.subr.mxu0 0.0
        %314 = vmatpush1.msra.mxu0 0.0
        %315 = vmatprep.subr.mxu0 0.0
        %316 = vmatpush1.msra.mxu0 0.0
        %317 = vmatprep.subr.mxu0 0.0
        %318 = vmatpush1.msra.mxu0 0.0
        %319 = vmatprep.mubr.f32.mxu0 0.0
        %320 = vmatmul.mubr.f32.gmra.mrb[0].mxu0 %v253
        %v321 = vpop.f32.mrb[0].mxu0
        %v322 = vadd.f32 %v249, %v321
        %v323 = vpop.f32.mrb[0].mxu0
        %324 = vdwg.mxu0
        %v325 = vtanh.pop %v322
        %326 = vst.msk [vmem:[%s231] sm:$0xff] %vm251, %v325
        %328 = vrot.lane.b32.xlu0 %v322, 96
        %v329 = vpop.permute.xlu0 %328
        %331 = vst.msk [vmem:[%s238] sm:$0xff] %vm251, %v329
        %s332 = sand.u32 %s102, 1
        %s333 = scalar_lea.sflag [#allocation4], %s332
        %s334 = sand.u32 %s102, 1
        %s335 = smul.addr %s334, 8
        %s336 = scalar_lea.vmem [#allocation7], %s335
        %s337 = sand.u32 %s128, 1
        %s338 = scalar_lea.sflag [#allocation9], %s337
        %s339 = sand.u32 %s128, 1
        %s340 = smul.addr %s339, 8
        %s341 = scalar_lea.vmem [#allocation8], %s340
        // Predicated region
        $region41: #{tpu_custom_call.1} parent=31 // pred_check
          %p342 = pneg %p112
        $region42: #{tpu_custom_call.1} parent=31 // pred_check_branch
          %344 = sbr.rel (%p342) target = $region44
        $region43: #{tpu_custom_call.1} parent=31 // pred_region
          %s346 = ssub.s32 128, 128
          %347 = vsyncadd %s333, %s346
          %s348 = smul.addr %s26, 128
          %s349 = scalar_lea.hbm %s3, %s348
          %s351 = sshll.u32 %s336, 4
          %s352 = int_to_ptr.vmem [resolvable:$true] %s351
          %354 = dma.vmem_to_hbm [thread:$0]  %s352, 128, %s349, %s333
        $region44: #{tpu_custom_call.1} parent=31 // pred_fallthru
          _
        // Predicated region
        $region45: #{tpu_custom_call.1} parent=31 // pred_check
          %p355 = pneg %p138
        $region46: #{tpu_custom_call.1} parent=31 // pred_check_branch
          %357 = sbr.rel (%p355) target = $region48
        $region47: #{tpu_custom_call.1} parent=31 // pred_region
          %s359 = ssub.s32 128, 128
          %360 = vsyncadd %s338, %s359
          %s361 = smul.addr %s26, 128
          %s362 = scalar_lea.hbm %s4, %s361
          %s364 = sshll.u32 %s341, 4
          %s365 = int_to_ptr.vmem [resolvable:$true] %s364
          %367 = dma.vmem_to_hbm [thread:$0]  %s365, 128, %s362, %s338
        $region48: #{tpu_custom_call.1} parent=31 // pred_fallthru
          _
      $region32: #{tpu_custom_call.1} parent=5 // pred_fallthru
        _
      %p368 = scmp.le.s32.totalorder 2, %s21
      // Predicated region
      $region49: #{tpu_custom_call.1} parent=5 // pred_check
        %p369 = pneg %p368
      $region50: #{tpu_custom_call.1} parent=5 // pred_check_branch
        %371 = sbr.rel (%p369) target = $region52
      $region51: #{tpu_custom_call.1} parent=5 // pred_region
        %s372 = ssub.s32 %s21, 2
        // Predicated region
        $region53: #{tpu_custom_call.1} parent=51 // pred_check
          %p373 = pneg %p118
        $region54: #{tpu_custom_call.1} parent=51 // pred_check_branch
          %375 = sbr.rel (%p373) target = $region56
        $region55: #{tpu_custom_call.1} parent=51 // pred_region
          %s376 = sand.u32 %s103, 1
          %s377 = scalar_lea.sflag [#allocation4], %s376
          %s378 = sand.u32 %s103, 1
          %s379 = smul.addr %s378, 8
          %s380 = scalar_lea.vmem [#allocation7], %s379
          %381 = dma.done %s377, 128
        $region56: #{tpu_custom_call.1} parent=51 // pred_fallthru
          _
        // Predicated region
        $region57: #{tpu_custom_call.1} parent=51 // pred_check
          %p382 = pneg %p144
        $region58: #{tpu_custom_call.1} parent=51 // pred_check_branch
          %384 = sbr.rel (%p382) target = $region60
        $region59: #{tpu_custom_call.1} parent=51 // pred_region
          %s385 = sand.u32 %s129, 1
          %s386 = scalar_lea.sflag [#allocation9], %s385
          %s387 = sand.u32 %s129, 1
          %s388 = smul.addr %s387, 8
          %s389 = scalar_lea.vmem [#allocation8], %s388
          %390 = dma.done %s386, 128
        $region60: #{tpu_custom_call.1} parent=51 // pred_fallthru
          _
      $region52: #{tpu_custom_call.1} parent=5 // pred_fallthru
        _
    $region6: #{tpu_custom_call.1} parent=1 // loop_footer
      %s25 = sadd.s32 1, %s21
    $region7: #{tpu_custom_call.1} parent=1 // loop_footer_branch
      %20 = sbr.rel target = $region3
    $region8: #{tpu_custom_call.1} parent=1 // loop_exit
      _
    %391 = vsyncpa [#allocation3], 1
    %s392 = scalar_lea.sflag [#allocation3], 1
    %393 = vsyncpa %s392, 1
    %394 = vsyncpa [#allocation6], 1
    %395 = vsyncpa [#allocation4], 1
    %s396 = scalar_lea.sflag [#allocation4], 1
    %397 = vsyncpa %s396, 1
    %398 = vsyncpa [#allocation9], 1
    %s399 = scalar_lea.sflag [#allocation9], 1
    %400 = vsyncpa %s399, 1

</llo_original>
